<compile_context>
chip_gen: v7x
topology: tpu7x:2x2x1
jax: 0.10.0
libtpu: 0.0.40
codegen_flags: <defaults>
</compile_context>

<pallas_src>
import functools

import jax
import jax.numpy as jnp
from jax.experimental import pallas as pl
from jax.experimental.pallas import tpu as pltpu


def _or_window_max_kernel(temp_ref, w_ref, out_ref, *, kernel_size, span_out):
    """K-step windowed weighted max over lane-dense (tN, L) slabs.

    temp_ref: (tN, L)        VMEM  -- Eventually-over-T already applied.
    w_ref:    (1, K)         SMEM  -- read as scalars, one per k step.
    out_ref:  (tN, span_out) VMEM  -- span_out = stride-0 window-start width
                                      (possibly lane-padded to a mult. of 128).
    """
    temp = temp_ref[...]

    # acc[:, j] = max_k temp[:, j + k] * W[k].  Only contiguous (unit-stride)
    # lane slices; weights come from SMEM as scalars so no per-iteration
    # VMEM-tile broadcast is emitted.  K is small (typical STL kernels), so a
    # fully unrolled loop keeps everything visible to the LLO scheduler.
    acc = temp[:, 0:span_out] * w_ref[0, 0]
    for k in range(1, kernel_size):
        acc = jnp.maximum(acc, temp[:, k:k + span_out] * w_ref[0, k])

    out_ref[...] = acc.astype(out_ref.dtype)  # single lane-dense store


def or_convolution_2d(x, weight, *, kernel_size, stride,
                      vmem_budget_bytes=24 * 1024 * 1024):
    """Pallas wrapper matching Or_Convolution_2d.forward semantics.

    x: (N, L, T) array, weight: (1, kernel_size). Returns (N, num_windows).
    """
    N, L, T = x.shape
    K = kernel_size
    step = stride + 1                      # window-start step in the PyTorch code
    num_windows = (L - K) // step + 1
    assert num_windows > 0, "L too small for this kernel_size / stride"
    span = (num_windows - 1) * step + 1    # stride-0 ("full") window-start width

    # Eventually over the inner temporal axis T as one fused XLA minor-axis
    # reduce: reads x once, writes the T-times-smaller (N, L) array, and
    # leaves L on lanes so the kernel needs no relayout.  (Replaces the old
    # HBM->HBM transpose that tripled HBM traffic.)
    temp = jnp.max(x, axis=-1)             # (N, L)

    # Lane-dense output: pad the window-start span up to a multiple of 128
    # when the extra window starts still fall inside L (no OOB lane slices,
    # no input padding).  Otherwise keep the exact span -- the output is tiny
    # relative to the input read, so a masked store there is noise.
    span_pad = ((span + 127) // 128) * 128
    span_out = span_pad if span_pad + K - 1 <= L else span

    # Batch tile: budget covers the double-buffered input block, the acc
    # intermediate and the double-buffered output block (not just the input),
    # so a tile that compiles on v5e/v6e does not overflow v7x's 64 MiB VMEM.
    itemsize = jnp.dtype(temp.dtype).itemsize
    if N <= 8:
        tN = N                              # block dim == full array dim is legal
    else:
        bytes_per_row = (2 * L + span_out + 2 * span_out) * itemsize
        max_rows = max(8, vmem_budget_bytes // max(bytes_per_row, 1))
        # v7x megacore: cap at ~ceil(N/2) so the "parallel" grid axis has at
        # least 2 steps and both TensorCores get work.
        half = ((-(-N // 2)) + 7) // 8 * 8
        tN = min(max_rows, half, N)
        tN = max(8, (tN // 8) * 8)          # f32 sublane packing / (8,128) rule
    grid = (pl.cdiv(N, tN),)

    kernel = functools.partial(
        _or_window_max_kernel, kernel_size=K, span_out=span_out)

    out_full = pl.pallas_call(
        kernel,
        out_shape=jax.ShapeDtypeStruct((N, span_out), x.dtype),
        grid=grid,
        in_specs=[
            pl.BlockSpec((tN, L), lambda i: (i, 0)),
            pl.BlockSpec(memory_space=pltpu.MemorySpace.SMEM),  # (1, K) weight
        ],
        out_specs=pl.BlockSpec((tN, span_out), lambda i: (i, 0)),
        compiler_params=pltpu.CompilerParams(
            dimension_semantics=("parallel",),   # shard batch tiles across TCs (v7x)
            vmem_limit_bytes=48 * 1024 * 1024,   # safe on v7x (64 MiB physical)
        ),
    )(temp, weight)

    # Down-select the stride-`step` window starts; done on the tiny output
    # (lane-strided gathers have no cheap Mosaic lowering in-kernel).
    return out_full[:, :span:step]


def _reference(x, weight, *, kernel_size, stride):
    """Pure-JAX reference mirroring the PyTorch forward loop."""
    temp = jnp.max(x, axis=-1)                     # Eventually(input) -> (N, L)
    N, L = temp.shape
    outs = []
    for i in range(0, L - kernel_size + 1, stride + 1):
        rho = temp[:, i:i + kernel_size] * weight  # (N, K)
        outs.append(jnp.max(rho, axis=-1, keepdims=True))
    return jnp.concatenate(outs, axis=1)


if __name__ == "__main__":
    key = jax.random.PRNGKey(0)
    kx, kw, kx2 = jax.random.split(key, 3)

    # Small shapes consistent with the module: batch=2, seq len L=16, inner T=8.
    N, L, T = 2, 16, 8
    kernel_size = 4
    stride = 1

    x = jax.random.normal(kx, (N, L, T), dtype=jnp.float32)
    # nn.init.uniform_(self.Or_2d_weight, 0.3, 0.7), shape (1, kernel_size)
    weight = jax.random.uniform(
        kw, (1, kernel_size), dtype=jnp.float32, minval=0.3, maxval=0.7
    )

    out = or_convolution_2d(x, weight, kernel_size=kernel_size, stride=stride)
    out = jax.block_until_ready(out)
    ref = _reference(x, weight, kernel_size=kernel_size, stride=stride)
    assert out.shape == ref.shape, (out.shape, ref.shape)
    assert jnp.allclose(out, ref, atol=1e-6, rtol=1e-6), "mismatch vs reference"

    # Second check exercising the multi-step batch grid (tN cap) path.
    N2, L2, T2, K2, S2 = 32, 64, 4, 3, 0
    x2 = jax.random.normal(kx2, (N2, L2, T2), dtype=jnp.float32)
    out2 = or_convolution_2d(x2, weight[:, :K2], kernel_size=K2, stride=S2)
    out2 = jax.block_until_ready(out2)
    ref2 = _reference(x2, weight[:, :K2], kernel_size=K2, stride=S2)
    assert out2.shape == ref2.shape, (out2.shape, ref2.shape)
    assert jnp.allclose(out2, ref2, atol=1e-6, rtol=1e-6), "mismatch vs reference (2)"

    print("KERNEL_OK")
</pallas_src>

<mosaic_0001>
module attributes {stable_mosaic.version = 11 : i64} {
  func.func @_or_window_max_kernel(%arg0: i32, %arg1: memref<2x16xf32, #tpu.memory_space<vmem>>, %arg2: memref<1x4xf32, #tpu.memory_space<smem>>, %arg3: memref<2x13xf32, #tpu.memory_space<vmem>>) attributes {dimension_semantics = [#tpu.dimension_semantics<parallel>], iteration_bounds = array<i64: 1>, scalar_prefetch = 0 : i64, scratch_operands = 0 : i64, tpu.core_type = #tpu.core_type<tc>, window_params = [{transform_indices = @transform_0, window_bounds = array<i64: 2, 16>}, {transform_indices = @transform_1, window_bounds = array<i64: 1, 4>}, {transform_indices = @transform_2, window_bounds = array<i64: 2, 13>}]} {
    %c0 = arith.constant 0 : index
    %c0_0 = arith.constant 0 : index
    %0 = vector.load %arg1[%c0, %c0_0] : memref<2x16xf32, #tpu.memory_space<vmem>>, vector<2x16xf32>
    %1 = vector.extract_strided_slice %0 {offsets = [0, 0], sizes = [2, 13], strides = [1, 1]} : vector<2x16xf32> to vector<2x13xf32>
    %c0_1 = arith.constant 0 : index
    %c0_2 = arith.constant 0 : index
    %2 = memref.load %arg2[%c0_1, %c0_2] : memref<1x4xf32, #tpu.memory_space<smem>>
    %3 = vector.broadcast %2 : f32 to vector<2x13xf32>
    %4 = arith.mulf %1, %3 : vector<2x13xf32>
    %5 = vector.extract_strided_slice %0 {offsets = [0, 1], sizes = [2, 13], strides = [1, 1]} : vector<2x16xf32> to vector<2x13xf32>
    %c0_3 = arith.constant 0 : index
    %c1 = arith.constant 1 : index
    %6 = memref.load %arg2[%c0_3, %c1] : memref<1x4xf32, #tpu.memory_space<smem>>
    %7 = vector.broadcast %6 : f32 to vector<2x13xf32>
    %8 = arith.mulf %5, %7 : vector<2x13xf32>
    %9 = arith.maximumf %4, %8 : vector<2x13xf32>
    %10 = vector.extract_strided_slice %0 {offsets = [0, 2], sizes = [2, 13], strides = [1, 1]} : vector<2x16xf32> to vector<2x13xf32>
    %c0_4 = arith.constant 0 : index
    %c2 = arith.constant 2 : index
    %11 = memref.load %arg2[%c0_4, %c2] : memref<1x4xf32, #tpu.memory_space<smem>>
    %12 = vector.broadcast %11 : f32 to vector<2x13xf32>
    %13 = arith.mulf %10, %12 : vector<2x13xf32>
    %14 = arith.maximumf %9, %13 : vector<2x13xf32>
    %15 = vector.extract_strided_slice %0 {offsets = [0, 3], sizes = [2, 13], strides = [1, 1]} : vector<2x16xf32> to vector<2x13xf32>
    %c0_5 = arith.constant 0 : index
    %c3 = arith.constant 3 : index
    %16 = memref.load %arg2[%c0_5, %c3] : memref<1x4xf32, #tpu.memory_space<smem>>
    %17 = vector.broadcast %16 : f32 to vector<2x13xf32>
    %18 = arith.mulf %15, %17 : vector<2x13xf32>
    %19 = arith.maximumf %14, %18 : vector<2x13xf32>
    %c0_6 = arith.constant 0 : index
    %c0_7 = arith.constant 0 : index
    %20 = vector.load %arg3[%c0_6, %c0_7] : memref<2x13xf32, #tpu.memory_space<vmem>>, vector<2x13xf32>
    tpu.vector_store %arg3[%c0_6, %c0_7], %19 {strides = array<i32>} : memref<2x13xf32, #tpu.memory_space<vmem>>, vector<2x13xf32>,
    return
  }
  func.func @transform_0(%arg0: i32) -> (i32, i32) {
    %c0_i32 = arith.constant 0 : i32
    %c0_i32_0 = arith.constant 0 : i32
    return %arg0, %c0_i32 : i32, i32
  }
  func.func @transform_1(%arg0: i32) -> (i32, i32) {
    %c0_i32 = arith.constant 0 : i32
    %c0_i32_0 = arith.constant 0 : i32
    %c0_i32_1 = arith.constant 0 : i32
    return %c0_i32, %c0_i32_0 : i32, i32
  }
  func.func @transform_2(%arg0: i32) -> (i32, i32) {
    %c0_i32 = arith.constant 0 : i32
    %c0_i32_0 = arith.constant 0 : i32
    return %arg0, %c0_i32 : i32, i32
  }
}

</mosaic_0001>

<llo_original>
// kernel: tpu_custom_call.1
$region0: #{tpu_custom_call.1}
  #allocation0 [shape = 'u32[]', space=smem, size = 0x4, offset = 0x4, fixed_abs, tag = 'smem constant byte address 0x4 - core index']
  #allocation1 [shape = 'u32[144,128]{1,0:T(1,128)}', space=vmem, size = 0x12000, scoped, tag = 'internal scratch']
  %s0 = inlined_call_operand.hbm [shape: f32[2,16], index: 0, kind: input, shape index: {}]
  %s1 = inlined_call_operand.vmem [shape: f32[1,4], index: 1, kind: input, shape index: {}]
  %s2 = inlined_call_operand.hbm [shape: f32[2,13], index: 2, kind: output, shape index: {}]
  %s3 = sld [smem:[#allocation0]]
  $region26: #{tpu_custom_call.1} parent=0
    _
  %s5 = ssub.s32 1, %s3
  %s6 = scalar_select 0, %s5, %s3
  $region1: #{tpu_custom_call.1} parent=0
    #allocation2 [shape = 'u8[1024]{0}', space=vmem, size = 0x400, scoped, tag = 'input window, operand 0, single buffered']
    #allocation3 [shape = 's32[1]{0}', space=sflag, size = 0x4, scoped, tag = 'scoped memory for tpu_custom_call.1']
    #allocation4 [shape = 's32[1]{0}', space=sflag, size = 0x4, scoped, tag = 'scoped memory for tpu_custom_call.1']
    #allocation5 [shape = 's32[1]{0}', space=sflag, size = 0x4, scoped, tag = 'scoped memory for tpu_custom_call.1']
    #allocation6 [shape = 'u8[512]{0}', space=smem, size = 0x200, scoped, tag = 'input window, operand 1, single buffered']
    #allocation7 [shape = 'u8[1024]{0}', space=vmem, size = 0x400, scoped, tag = 'output window, operand 0, single buffered']
    %7 = vsyncpa [#allocation3], 0
    %8 = vsyncpa [#allocation5], 0
    %9 = vsyncpa [#allocation4], 0
    // Predicated region
    $region2: #{tpu_custom_call.1} parent=1 // pred_check
      _
    $region3: #{tpu_custom_call.1} parent=1 // pred_check_branch
      %11 = sbr.rel (0) target = $region5
    $region4: #{tpu_custom_call.1} parent=1 // pred_region
      %s13 = ssub.s32 32, 32
      %14 = vsyncadd [#allocation3], %s13
      %s16 = sshll.u32 [#allocation2], 4
      %s17 = int_to_ptr.vmem [resolvable:$true] %s16
      %19 = dma.hbm_to_vmem [thread:$0]  %s0, 32, %s17, [#allocation3]
    $region5: #{tpu_custom_call.1} parent=1 // pred_fallthru
      _
    // Predicated region
    $region6: #{tpu_custom_call.1} parent=1 // pred_check
      _
    $region7: #{tpu_custom_call.1} parent=1 // pred_check_branch
      %21 = sbr.rel (0) target = $region9
    $region8: #{tpu_custom_call.1} parent=1 // pred_region
      %s23 = ssub.s32 16, 16
      %24 = vsyncadd [#allocation5], %s23
      %s26 = sshll.u32 %s1, 4
      %s27 = int_to_ptr.vmem [resolvable:$true] %s26
      %29 = dma.vmem_to_smem %s27, 16, [#allocation6], [#allocation5]
    $region9: #{tpu_custom_call.1} parent=1 // pred_fallthru
      _
    // Predicated region
    $region10: #{tpu_custom_call.1} parent=1 // pred_check
      _
    $region11: #{tpu_custom_call.1} parent=1 // pred_check_branch
      %31 = sbr.rel (0) target = $region13
    $region12: #{tpu_custom_call.1} parent=1 // pred_region
      %32 = dma.done [#allocation3], 32
    $region13: #{tpu_custom_call.1} parent=1 // pred_fallthru
      _
    // Predicated region
    $region14: #{tpu_custom_call.1} parent=1 // pred_check
      _
    $region15: #{tpu_custom_call.1} parent=1 // pred_check_branch
      %34 = sbr.rel (0) target = $region17
    $region16: #{tpu_custom_call.1} parent=1 // pred_region
      %35 = dma.done [#allocation5], 16
    $region17: #{tpu_custom_call.1} parent=1 // pred_fallthru
      _
    %36 = sfence
    %v37 = vld [vmem:[#allocation2] sm:$0x3]
    %s38 = sld [smem:[#allocation6]]
    %v39 = vstv %s38
    %v40 = vmul.f32 %v37, %v39
    %s41 = sld [smem:[#allocation6 + $0x1]]
    %v42 = vstv %s41
    %v43 = vmul.f32 %v37, %v42
    %45 = vrot.lane.b32.xlu0 %v43, 127
    %v46 = vpop.permute.xlu0 %45
    %v48 = vmax.f32 %v40, %v46
    %s49 = sld [smem:[#allocation6 + $0x2]]
    %v50 = vstv %s49
    %v51 = vmul.f32 %v37, %v50
    %53 = vrot.lane.b32.xlu0 %v51, 126
    %v54 = vpop.permute.xlu0 %53
    %v56 = vmax.f32 %v48, %v54
    %s57 = sld [smem:[#allocation6 + $0x3]]
    %v58 = vstv %s57
    %v59 = vmul.f32 %v37, %v58
    %61 = vrot.lane.b32.xlu0 %v59, 125
    %v62 = vpop.permute.xlu0 %61
    %v64 = vmax.f32 %v56, %v62
    %vm65 = vcmask 99328
    %66 = vst.msk [vmem:[#allocation7] sm:$0x3] %vm65, %v64
    // Predicated region
    $region18: #{tpu_custom_call.1} parent=1 // pred_check
      _
    $region19: #{tpu_custom_call.1} parent=1 // pred_check_branch
      %68 = sbr.rel (0) target = $region21
    $region20: #{tpu_custom_call.1} parent=1 // pred_region
      %s70 = ssub.s32 32, 32
      %71 = vsyncadd [#allocation4], %s70
      %s73 = sshll.u32 [#allocation7], 4
      %s74 = int_to_ptr.vmem [resolvable:$true] %s73
      %76 = dma.vmem_to_hbm [thread:$0]  %s74, 32, %s2, [#allocation4]
    $region21: #{tpu_custom_call.1} parent=1 // pred_fallthru
      _
    // Predicated region
    $region22: #{tpu_custom_call.1} parent=1 // pred_check
      _
    $region23: #{tpu_custom_call.1} parent=1 // pred_check_branch
      %78 = sbr.rel (0) target = $region25
    $region24: #{tpu_custom_call.1} parent=1 // pred_region
      %79 = dma.done [#allocation4], 32
    $region25: #{tpu_custom_call.1} parent=1 // pred_fallthru
      _
    %80 = vsyncpa [#allocation3], 1
    %81 = vsyncpa [#allocation4], 1
    %82 = vsyncpa [#allocation5], 1

</llo_original>
